<compile_context>
chip_gen: v7x
topology: tpu7x:2x2x1
jax: 0.10.0
libtpu: 0.0.40
codegen_flags: <defaults>
</compile_context>

<pallas_src>
import jax
import jax.numpy as jnp
from jax import lax
from jax.experimental import pallas as pl
from jax.experimental.pallas import tpu as pltpu

# ----------------------------- model dims -----------------------------------
VOCAB_SIZE = 32
EMBEDD_DIM = 16
HIDDEN_SIZE = 32
NUM_CLASS = 4
OUT_PAD = 128          # lane-dense padded class dim


# ----------------------------- pallas kernel --------------------------------
def textmodel_kernel(text_ref, offs_ref, w1_ref, w2_ref, out_ref):
    # text_ref: [T, 1] int32 token ids, offs_ref: [B, 1] int32 bag starts
    # w1_ref:   [VOCAB+1, HIDDEN]  (row VOCAB is the hidden bias)
    # w2_ref:   [HIDDEN+1, OUT_PAD] (row HIDDEN is the fc bias, class dim padded)
    T = text_ref.shape[0]
    B = offs_ref.shape[0]

    # --- bag membership from offsets (sorted, offsets[0] == 0) ---------------
    tok_iota = lax.broadcasted_iota(jnp.int32, (B, T), 1)           # token idx
    bag_iota = lax.broadcasted_iota(jnp.int32, (B, T), 0)           # bag idx
    # bag_id[t] = (# offsets <= t) - 1
    ge = (tok_iota >= offs_ref[...]).astype(jnp.int32)              # [B, T]
    bag_id = ge.sum(axis=0, keepdims=True) - 1                      # [1, T]
    mask = (bag_iota == bag_id).astype(jnp.float32)                 # [B, T]
    counts = mask.sum(axis=1, keepdims=True)                        # [B, 1]
    mask_norm = mask / jnp.maximum(counts, 1.0)                     # mean weights

    # --- normalized bag-of-words histogram: [B, T] @ [T, V] -> [B, V] --------
    onehot = (text_ref[...] ==
              lax.broadcasted_iota(jnp.int32, (T, VOCAB_SIZE), 1)
              ).astype(jnp.float32)                                 # [T, V]
    bow = jnp.dot(mask_norm, onehot, preferred_element_type=jnp.float32)

    # --- fused embedding + hidden layer: relu(bow @ W1 + b1) -----------------
    w1 = w1_ref[:VOCAB_SIZE, :]
    b1 = w1_ref[VOCAB_SIZE:VOCAB_SIZE + 1, :]
    hidden = jnp.maximum(
        jnp.dot(bow, w1, preferred_element_type=jnp.float32) + b1, 0.0)

    # --- output layer (lane-dense, padded to 128 classes) --------------------
    w2 = w2_ref[:HIDDEN_SIZE, :]
    b2 = w2_ref[HIDDEN_SIZE:HIDDEN_SIZE + 1, :]
    out_ref[...] = jnp.dot(hidden, w2, preferred_element_type=jnp.float32) + b2


# ----------------------------- parameter prep (once) -------------------------
def prepare_params(params):
    """Fold embedding into the hidden weight, pack biases, pad class dim."""
    emb_w, hid_w, hid_b, fc_w, fc_b = params
    # W1 = emb_w @ hid_w.T : [VOCAB, HIDDEN]  (exact: ReLU is the first nonlin.)
    w1 = jnp.dot(emb_w, hid_w.T)
    w1aug = jnp.concatenate([w1, hid_b.reshape(1, HIDDEN_SIZE)], axis=0)
    # W2 = fc_w.T padded to 128 output lanes, bias packed as last row.
    w2 = jnp.zeros((HIDDEN_SIZE, OUT_PAD), jnp.float32)
    w2 = w2.at[:, :NUM_CLASS].set(fc_w.T)
    b2 = jnp.zeros((1, OUT_PAD), jnp.float32).at[0, :NUM_CLASS].set(fc_b)
    w2aug = jnp.concatenate([w2, b2], axis=0)
    return w1aug.astype(jnp.float32), w2aug.astype(jnp.float32)


# ----------------------------- forward wrapper --------------------------------
def text_model_forward(text, offsets, prepped):
    """text: int32[T], offsets: int32[B] -> float32[B, NUM_CLASS]"""
    w1aug, w2aug = prepped
    B = offsets.shape[0]
    text2d = text.reshape(-1, 1).astype(jnp.int32)       # [T, 1]
    offs2d = offsets.reshape(-1, 1).astype(jnp.int32)    # [B, 1]

    vmem = pl.BlockSpec(memory_space=pltpu.MemorySpace.VMEM)
    out_pad = pl.pallas_call(
        textmodel_kernel,
        out_shape=jax.ShapeDtypeStruct((B, OUT_PAD), jnp.float32),
        in_specs=[vmem, vmem, vmem, vmem],
        out_specs=vmem,
    )(text2d, offs2d, w1aug, w2aug)
    return out_pad[:, :NUM_CLASS]


# ----------------------------- deterministic params --------------------------
def init_params(key):
    k0, k1, k2, k3 = jax.random.split(key, 4)
    initrange = 0.5
    emb_w = jax.random.uniform(k0, (VOCAB_SIZE, EMBEDD_DIM), jnp.float32,
                               -initrange, initrange)
    hid_w = jax.random.uniform(k1, (HIDDEN_SIZE, EMBEDD_DIM), jnp.float32,
                               -initrange, initrange)
    # hidden.bias keeps default Linear init (not zeroed in init_weights)
    bound = 1.0 / jnp.sqrt(EMBEDD_DIM)
    hid_b = jax.random.uniform(k2, (HIDDEN_SIZE,), jnp.float32, -bound, bound)
    fc_w = jax.random.uniform(k3, (NUM_CLASS, HIDDEN_SIZE), jnp.float32,
                              -initrange, initrange)
    fc_b = jnp.zeros((NUM_CLASS,), jnp.float32)   # fc.bias zeroed
    return emb_w, hid_w, hid_b, fc_w, fc_b


# ----------------------------- reference (pure JAX) --------------------------
def reference_forward(text, offsets, params):
    emb_w, hid_w, hid_b, fc_w, fc_b = params
    T = text.shape[0]
    ends = jnp.concatenate([offsets[1:], jnp.array([T], dtype=offsets.dtype)])
    tok = jnp.arange(T, dtype=offsets.dtype)
    mask = (tok[None, :] >= offsets[:, None]) & (tok[None, :] < ends[:, None])
    counts = jnp.maximum(mask.sum(axis=1, keepdims=True), 1).astype(jnp.float32)
    gathered = emb_w[text]                                  # [T, D]
    embedded = (mask.astype(jnp.float32) @ gathered) / counts
    hidden = jnp.maximum(embedded @ hid_w.T + hid_b, 0.0)
    return hidden @ fc_w.T + fc_b


if __name__ == "__main__":
    key = jax.random.PRNGKey(0)
    kp, kt = jax.random.split(key)
    params = init_params(kp)
    prepped = prepare_params(params)     # folded/packed weights, done once

    # small example: 8 bags over a flat stream of 24 tokens (variable lengths)
    B, T = 8, 24
    text = jax.random.randint(kt, (T,), 0, VOCAB_SIZE, dtype=jnp.int32)
    lengths = jnp.array([3, 2, 4, 3, 3, 2, 4, 3], dtype=jnp.int32)   # sums to 24
    offsets = jnp.concatenate([jnp.zeros((1,), jnp.int32),
                               jnp.cumsum(lengths)[:-1]]).astype(jnp.int32)

    fwd = jax.jit(text_model_forward)
    out = fwd(text, offsets, prepped)
    out = jax.block_until_ready(out)

    ref = reference_forward(text, offsets, params)
    assert out.shape == (B, NUM_CLASS)
    assert jnp.allclose(out, ref, atol=1e-4, rtol=1e-4), "mismatch vs reference"
    print("KERNEL_OK")
</pallas_src>

<mosaic_0001>
module attributes {stable_mosaic.version = 11 : i64} {
  func.func @textmodel_kernel(%arg0: memref<24x1xi32, #tpu.memory_space<vmem>>, %arg1: memref<8x1xi32, #tpu.memory_space<vmem>>, %arg2: memref<33x32xf32, #tpu.memory_space<vmem>>, %arg3: memref<33x128xf32, #tpu.memory_space<vmem>>, %arg4: memref<8x128xf32, #tpu.memory_space<vmem>>) attributes {dimension_semantics = [], scalar_prefetch = 0 : i64, scratch_operands = 0 : i64, tpu.core_type = #tpu.core_type<tc>} {
    %0 = tpu.iota {dimensions = array<i32: 1>} : vector<8x24xi32>
    %1 = tpu.iota {dimensions = array<i32: 0>} : vector<8x24xi32>
    %c0 = arith.constant 0 : index
    %c0_0 = arith.constant 0 : index
    %2 = vector.load %arg1[%c0, %c0_0] : memref<8x1xi32, #tpu.memory_space<vmem>>, vector<8x1xi32>
    %3 = vector.broadcast %2 : vector<8x1xi32> to vector<8x24xi32>
    %4 = arith.cmpi sge, %0, %3 : vector<8x24xi32>
    %5 = arith.extui %4 : vector<8x24xi1> to vector<8x24xi32>
    %cst = arith.constant dense<0> : vector<24xi32>
    %6 = vector.multi_reduction <add>, %5, %cst [0] : vector<8x24xi32> to vector<24xi32>
    %7 = vector.shape_cast %6 : vector<24xi32> to vector<1x24xi32>
    %c1_i32 = arith.constant 1 : i32
    %8 = vector.broadcast %c1_i32 : i32 to vector<1x24xi32>
    %9 = arith.subi %7, %8 : vector<1x24xi32>
    %10 = vector.broadcast %9 : vector<1x24xi32> to vector<8x24xi32>
    %11 = arith.cmpi eq, %1, %10 : vector<8x24xi32>
    %12 = arith.extui %11 : vector<8x24xi1> to vector<8x24xi32>
    %13 = arith.sitofp %12 : vector<8x24xi32> to vector<8x24xf32>
    %cst_1 = arith.constant dense<0.000000e+00> : vector<8xf32>
    %14 = vector.multi_reduction <add>, %13, %cst_1 [1] : vector<8x24xf32> to vector<8xf32>
    %15 = vector.shape_cast %14 : vector<8xf32> to vector<8x1xf32>
    %cst_2 = arith.constant 1.000000e+00 : f32
    %16 = vector.broadcast %cst_2 : f32 to vector<8x1xf32>
    %17 = arith.maximumf %15, %16 : vector<8x1xf32>
    %18 = vector.broadcast %17 : vector<8x1xf32> to vector<8x24xf32>
    %19 = arith.divf %13, %18 : vector<8x24xf32>
    %c0_3 = arith.constant 0 : index
    %c0_4 = arith.constant 0 : index
    %20 = vector.load %arg0[%c0_3, %c0_4] : memref<24x1xi32, #tpu.memory_space<vmem>>, vector<24x1xi32>
    %21 = tpu.iota {dimensions = array<i32: 1>} : vector<24x32xi32>
    %22 = vector.broadcast %20 : vector<24x1xi32> to vector<24x32xi32>
    %23 = arith.cmpi eq, %22, %21 : vector<24x32xi32>
    %24 = arith.extui %23 : vector<24x32xi1> to vector<24x32xi32>
    %25 = arith.sitofp %24 : vector<24x32xi32> to vector<24x32xf32>
    %cst_5 = arith.constant dense<0.000000e+00> : vector<8x32xf32>
    %26 = tpu.matmul %19, %25, %cst_5 {dimension_numbers = #tpu.dot_dimension_numbers<[1], [0], [0], [1], [0, 0, 1, 1], [], []>} : vector<8x24xf32>, vector<24x32xf32>, vector<8x32xf32> -> vector<8x32xf32>
    %c0_6 = arith.constant 0 : index
    %c0_7 = arith.constant 0 : index
    %27 = vector.load %arg2[%c0_6, %c0_7] : memref<33x32xf32, #tpu.memory_space<vmem>>, vector<32x32xf32>
    %c32 = arith.constant 32 : index
    %c0_8 = arith.constant 0 : index
    %28 = vector.load %arg2[%c32, %c0_8] : memref<33x32xf32, #tpu.memory_space<vmem>>, vector<1x32xf32>
    %cst_9 = arith.constant dense<0.000000e+00> : vector<8x32xf32>
    %29 = tpu.matmul %26, %27, %cst_9 {dimension_numbers = #tpu.dot_dimension_numbers<[1], [0], [0], [1], [0, 0, 1, 1], [], []>} : vector<8x32xf32>, vector<32x32xf32>, vector<8x32xf32> -> vector<8x32xf32>
    %30 = vector.broadcast %28 : vector<1x32xf32> to vector<8x32xf32>
    %31 = arith.addf %29, %30 : vector<8x32xf32>
    %cst_10 = arith.constant 0.000000e+00 : f32
    %32 = vector.broadcast %cst_10 : f32 to vector<8x32xf32>
    %33 = arith.maximumf %31, %32 : vector<8x32xf32>
    %c0_11 = arith.constant 0 : index
    %c0_12 = arith.constant 0 : index
    %34 = vector.load %arg3[%c0_11, %c0_12] : memref<33x128xf32, #tpu.memory_space<vmem>>, vector<32x128xf32>
    %c32_13 = arith.constant 32 : index
    %c0_14 = arith.constant 0 : index
    %35 = vector.load %arg3[%c32_13, %c0_14] : memref<33x128xf32, #tpu.memory_space<vmem>>, vector<1x128xf32>
    %cst_15 = arith.constant dense<0.000000e+00> : vector<8x128xf32>
    %36 = tpu.matmul %33, %34, %cst_15 {dimension_numbers = #tpu.dot_dimension_numbers<[1], [0], [0], [1], [0, 0, 1, 1], [], []>} : vector<8x32xf32>, vector<32x128xf32>, vector<8x128xf32> -> vector<8x128xf32>
    %37 = vector.broadcast %35 : vector<1x128xf32> to vector<8x128xf32>
    %38 = arith.addf %36, %37 : vector<8x128xf32>
    %c0_16 = arith.constant 0 : index
    %c0_17 = arith.constant 0 : index
    %39 = vector.load %arg4[%c0_16, %c0_17] : memref<8x128xf32, #tpu.memory_space<vmem>>, vector<8x128xf32>
    tpu.vector_store %arg4[%c0_16, %c0_17], %38 {strides = array<i32>} : memref<8x128xf32, #tpu.memory_space<vmem>>, vector<8x128xf32>,
    return
  }
}

</mosaic_0001>

<llo_original>
// kernel: text_model_forward.1
$region0: #{text_model_forward.1}
  #allocation0 [shape = 'u32[]', space=smem, size = 0x4, offset = 0x4, fixed_abs, tag = 'smem constant byte address 0x4 - core index']
  #allocation1 [shape = 'u32[144,128]{1,0:T(1,128)}', space=vmem, size = 0x12000, scoped, tag = 'internal scratch']
  %s0 = inlined_call_operand.vmem [shape: s32[24,1], index: 0, kind: input, shape index: {}]
  %s1 = inlined_call_operand.vmem [shape: s32[8,1], index: 1, kind: input, shape index: {}]
  %s2 = inlined_call_operand.vmem [shape: f32[33,32], index: 2, kind: input, shape index: {}]
  %s3 = inlined_call_operand.vmem [shape: f32[33,128], index: 3, kind: input, shape index: {}]
  %s4 = inlined_call_operand.vmem [shape: f32[8,128], index: 4, kind: output, shape index: {}]
  %s5 = sld [smem:[#allocation0]]
  $region26: #{text_model_forward.1} parent=0
    _
  %s7 = ssub.s32 1, %s5
  %s8 = scalar_select 0, %s7, %s5
  // Predicated region
  $region2: #{text_model_forward.1} parent=0 // pred_check
    _
  $region3: #{text_model_forward.1} parent=0 // pred_check_branch
    %10 = sbr.rel (0) target = $region5
  $region4: #{text_model_forward.1} parent=0 // pred_region
    _
  $region5: #{text_model_forward.1} parent=0 // pred_fallthru
    _
  // Predicated region
  $region6: #{text_model_forward.1} parent=0 // pred_check
    _
  $region7: #{text_model_forward.1} parent=0 // pred_check_branch
    %12 = sbr.rel (0) target = $region9
  $region8: #{text_model_forward.1} parent=0 // pred_region
    _
  $region9: #{text_model_forward.1} parent=0 // pred_fallthru
    _
  // Predicated region
  $region10: #{text_model_forward.1} parent=0 // pred_check
    _
  $region11: #{text_model_forward.1} parent=0 // pred_check_branch
    %14 = sbr.rel (0) target = $region13
  $region12: #{text_model_forward.1} parent=0 // pred_region
    _
  $region13: #{text_model_forward.1} parent=0 // pred_fallthru
    _
  // Predicated region
  $region14: #{text_model_forward.1} parent=0 // pred_check
    _
  $region15: #{text_model_forward.1} parent=0 // pred_check_branch
    %16 = sbr.rel (0) target = $region17
  $region16: #{text_model_forward.1} parent=0 // pred_region
    _
  $region17: #{text_model_forward.1} parent=0 // pred_fallthru
    _
  %v17 = vlaneseq
  %v18 = vand.u32 %v17, 127
  %v19 = vlaneseq
  %v20 = vshrl.u32 %v19, 7
  %v21 = vld [vmem:[%s1] sm:$0xff]
  %22 = vset.pattern.permute.xlu0 0
  %23 = vperm.xlu0 %22, %v21
  %v24 = vpop.permute.xlu0 %23
  %vm25 = vcmp.ge.s32.totalorder %v18, %v24
  %v26 = vsel %vm25, 1, 0
  %vm27 = vcmask 195584
  %v28 = vsel %vm27, %v26, 0
  %v29 = vrot.slane %v28, 4
  %v30 = vadd.s32 %v28, %v29
  %v31 = vrot.slane %v30, 2
  %v32 = vadd.s32 %v30, %v31
  %v33 = vrot.slane %v32, 1
  %v34 = vadd.s32 %v32, %v33
  %v35 = vsub.s32 %v34, 1
  %vm36 = vcmp.eq.s32.totalorder %v20, %v35
  %v37 = vsel %vm36, 1, 0
  %v38 = vcvt.s32.f32 %v37
  %v39 = vsel %vm27, %v38, 0.0
  %40 = vadd.xlane.f32.xlu0 %v39
  %v41 = vpop.xlane.xlu0 %40
  %v42 = vmax.f32 %v41, 1.0
  %v43 = vrcp.pop %v42
  %v44 = vmul.f32 %v38, %v43
  %v45 = vld [vmem:[%s0] sm:$0xff]
  %v46 = vld [vmem:[%s0 + $0x8] sm:$0xff]
  %v47 = vld [vmem:[%s0 + $0x10] sm:$0xff]
  %48 = vset.pattern.permute.xlu0 0
  %49 = vperm.xlu0 %48, %v45
  %v50 = vpop.permute.xlu0 %49
  %51 = vset.pattern.permute.xlu0 0
  %52 = vperm.xlu0 %51, %v46
  %v53 = vpop.permute.xlu0 %52
  %54 = vset.pattern.permute.xlu0 0
  %55 = vperm.xlu0 %54, %v47
  %v56 = vpop.permute.xlu0 %55
  %vm57 = vcmp.eq.s32.totalorder %v50, %v18
  %vm58 = vcmp.eq.s32.totalorder %v53, %v18
  %vm59 = vcmp.eq.s32.totalorder %v56, %v18
  %v60 = vsel %vm57, 1, 0
  %v61 = vsel %vm58, 1, 0
  %v62 = vsel %vm59, 1, 0
  %v63 = vcvt.s32.f32 %v60
  %v64 = vcvt.s32.f32 %v61
  %v65 = vcvt.s32.f32 %v62
  %v67 = vsel %vm27, %v44, 0
  %69 = vmatprep.subr.mxu0 0.0
  %70 = vmatpush1.msra.mxu0 %v63
  %71 = vmatprep.subr.mxu0 0.0
  %72 = vmatpush1.msra.mxu0 %v64
  %73 = vmatprep.subr.mxu0 0.0
  %74 = vmatpush1.msra.mxu0 %v65
  %75 = vmatprep.subr.mxu0 0.0
  %76 = vmatpush1.msra.mxu0 0.0
  %77 = vmatprep.subr.mxu0 0.0
  %78 = vmatpush1.msra.mxu0 0.0
  %79 = vmatprep.subr.mxu0 0.0
  %80 = vmatpush1.msra.mxu0 0.0
  %81 = vmatprep.subr.mxu0 0.0
  %82 = vmatpush1.msra.mxu0 0.0
  %83 = vmatprep.subr.mxu0 0.0
  %84 = vmatpush1.msra.mxu0 0.0
  %85 = vmatprep.subr.mxu0 0.0
  %86 = vmatpush1.msra.mxu0 0.0
  %87 = vmatprep.subr.mxu0 0.0
  %88 = vmatpush1.msra.mxu0 0.0
  %89 = vmatprep.subr.mxu0 0.0
  %90 = vmatpush1.msra.mxu0 0.0
  %91 = vmatprep.subr.mxu0 0.0
  %92 = vmatpush1.msra.mxu0 0.0
  %93 = vmatprep.subr.mxu0 0.0
  %94 = vmatpush1.msra.mxu0 0.0
  %95 = vmatprep.subr.mxu0 0.0
  %96 = vmatpush1.msra.mxu0 0.0
  %97 = vmatprep.subr.mxu0 0.0
  %98 = vmatpush1.msra.mxu0 0.0
  %99 = vmatprep.subr.mxu0 0.0
  %100 = vmatpush1.msra.mxu0 0.0
  %101 = vmatprep.subr.mxu0 0.0
  %102 = vmatpush1.msra.mxu0 0.0
  %103 = vmatprep.subr.mxu0 0.0
  %104 = vmatpush1.msra.mxu0 0.0
  %105 = vmatprep.subr.mxu0 0.0
  %106 = vmatpush1.msra.mxu0 0.0
  %107 = vmatprep.subr.mxu0 0.0
  %108 = vmatpush1.msra.mxu0 0.0
  %109 = vmatprep.subr.mxu0 0.0
  %110 = vmatpush1.msra.mxu0 0.0
  %111 = vmatprep.subr.mxu0 0.0
  %112 = vmatpush1.msra.mxu0 0.0
  %113 = vmatprep.subr.mxu0 0.0
  %114 = vmatpush1.msra.mxu0 0.0
  %115 = vmatprep.subr.mxu0 0.0
  %116 = vmatpush1.msra.mxu0 0.0
  %117 = vmatprep.subr.mxu0 0.0
  %118 = vmatpush1.msra.mxu0 0.0
  %119 = vmatprep.subr.mxu0 0.0
  %120 = vmatpush1.msra.mxu0 0.0
  %121 = vmatprep.subr.mxu0 0.0
  %122 = vmatpush1.msra.mxu0 0.0
  %123 = vmatprep.subr.mxu0 0.0
  %124 = vmatpush1.msra.mxu0 0.0
  %125 = vmatprep.subr.mxu0 0.0
  %126 = vmatpush1.msra.mxu0 0.0
  %127 = vmatprep.subr.mxu0 0.0
  %128 = vmatpush1.msra.mxu0 0.0
  %129 = vmatprep.subr.mxu0 0.0
  %130 = vmatpush1.msra.mxu0 0.0
  %131 = vmatprep.subr.mxu0 0.0
  %132 = vmatpush1.msra.mxu0 0.0
  %133 = vmatprep.mubr.f32.mxu0 0.0
  %134 = vmatmul.mubr.f32.gmra.mrb[0].mxu0 %v67
  %v135 = vpop.f32.mrb[0].mxu0
  %v136 = vadd.f32 0.0, %v135
  %v137 = vpop.f32.mrb[0].mxu0
  %138 = vdwg.mxu0
  %v139 = vld [vmem:[%s2] sm:$0xff]
  %v140 = vld [vmem:[%s2 + $0x8] sm:$0xff]
  %v141 = vld [vmem:[%s2 + $0x10] sm:$0xff]
  %v142 = vld [vmem:[%s2 + $0x18] sm:$0xff]
  %v143 = vld [vmem:[%s2 + $0x20] sm:$0x1]
  %v144 = vlaneseq
  %v145 = vshrl.u32 %v144, 7
  %v146 = vsub.s32 0, %v145
  %v147 = vrot.slane %v143, %v146
  %vm148 = vcmask 261120
  %v150 = vsel %vm148, %v136, 0
  %152 = vmatprep.subr.mxu0 0.0
  %153 = vmatpush1.msra.mxu0 %v139
  %154 = vmatprep.subr.mxu0 0.0
  %155 = vmatpush1.msra.mxu0 %v140
  %156 = vmatprep.subr.mxu0 0.0
  %157 = vmatpush1.msra.mxu0 %v141
  %158 = vmatprep.subr.mxu0 0.0
  %159 = vmatpush1.msra.mxu0 %v142
  %160 = vmatprep.subr.mxu0 0.0
  %161 = vmatpush1.msra.mxu0 0.0
  %162 = vmatprep.subr.mxu0 0.0
  %163 = vmatpush1.msra.mxu0 0.0
  %164 = vmatprep.subr.mxu0 0.0
  %165 = vmatpush1.msra.mxu0 0.0
  %166 = vmatprep.subr.mxu0 0.0
  %167 = vmatpush1.msra.mxu0 0.0
  %168 = vmatprep.subr.mxu0 0.0
  %169 = vmatpush1.msra.mxu0 0.0
  %170 = vmatprep.subr.mxu0 0.0
  %171 = vmatpush1.msra.mxu0 0.0
  %172 = vmatprep.subr.mxu0 0.0
  %173 = vmatpush1.msra.mxu0 0.0
  %174 = vmatprep.subr.mxu0 0.0
  %175 = vmatpush1.msra.mxu0 0.0
  %176 = vmatprep.subr.mxu0 0.0
  %177 = vmatpush1.msra.mxu0 0.0
  %178 = vmatprep.subr.mxu0 0.0
  %179 = vmatpush1.msra.mxu0 0.0
  %180 = vmatprep.subr.mxu0 0.0
  %181 = vmatpush1.msra.mxu0 0.0
  %182 = vmatprep.subr.mxu0 0.0
  %183 = vmatpush1.msra.mxu0 0.0
  %184 = vmatprep.subr.mxu0 0.0
  %185 = vmatpush1.msra.mxu0 0.0
  %186 = vmatprep.subr.mxu0 0.0
  %187 = vmatpush1.msra.mxu0 0.0
  %188 = vmatprep.subr.mxu0 0.0
  %189 = vmatpush1.msra.mxu0 0.0
  %190 = vmatprep.subr.mxu0 0.0
  %191 = vmatpush1.msra.mxu0 0.0
  %192 = vmatprep.subr.mxu0 0.0
  %193 = vmatpush1.msra.mxu0 0.0
  %194 = vmatprep.subr.mxu0 0.0
  %195 = vmatpush1.msra.mxu0 0.0
  %196 = vmatprep.subr.mxu0 0.0
  %197 = vmatpush1.msra.mxu0 0.0
  %198 = vmatprep.subr.mxu0 0.0
  %199 = vmatpush1.msra.mxu0 0.0
  %200 = vmatprep.subr.mxu0 0.0
  %201 = vmatpush1.msra.mxu0 0.0
  %202 = vmatprep.subr.mxu0 0.0
  %203 = vmatpush1.msra.mxu0 0.0
  %204 = vmatprep.subr.mxu0 0.0
  %205 = vmatpush1.msra.mxu0 0.0
  %206 = vmatprep.subr.mxu0 0.0
  %207 = vmatpush1.msra.mxu0 0.0
  %208 = vmatprep.subr.mxu0 0.0
  %209 = vmatpush1.msra.mxu0 0.0
  %210 = vmatprep.subr.mxu0 0.0
  %211 = vmatpush1.msra.mxu0 0.0
  %212 = vmatprep.subr.mxu0 0.0
  %213 = vmatpush1.msra.mxu0 0.0
  %214 = vmatprep.subr.mxu0 0.0
  %215 = vmatpush1.msra.mxu0 0.0
  %216 = vmatprep.mubr.f32.mxu0 0.0
  %217 = vmatmul.mubr.f32.gmra.mrb[0].mxu0 %v150
  %v218 = vpop.f32.mrb[0].mxu0
  %v219 = vadd.f32 %v147, %v218
  %v220 = vpop.f32.mrb[0].mxu0
  %221 = vdwg.mxu0
  %v222 = vmax.f32 %v219, 0.0
  %v223 = vld [vmem:[%s3] sm:$0xff]
  %v224 = vld [vmem:[%s3 + $0x8] sm:$0xff]
  %v225 = vld [vmem:[%s3 + $0x10] sm:$0xff]
  %v226 = vld [vmem:[%s3 + $0x18] sm:$0xff]
  %v227 = vld [vmem:[%s3 + $0x20] sm:$0x1]
  %v228 = vlaneseq
  %v229 = vshrl.u32 %v228, 7
  %v230 = vsub.s32 0, %v229
  %v231 = vrot.slane %v227, %v230
  %v233 = vsel %vm148, %v222, 0
  %235 = vmatprep.subr.mxu0 0.0
  %236 = vmatpush1.msra.mxu0 %v223
  %237 = vmatprep.subr.mxu0 0.0
  %238 = vmatpush1.msra.mxu0 %v224
  %239 = vmatprep.subr.mxu0 0.0
  %240 = vmatpush1.msra.mxu0 %v225
  %241 = vmatprep.subr.mxu0 0.0
  %242 = vmatpush1.msra.mxu0 %v226
  %243 = vmatprep.subr.mxu0 0.0
  %244 = vmatpush1.msra.mxu0 0.0
  %245 = vmatprep.subr.mxu0 0.0
  %246 = vmatpush1.msra.mxu0 0.0
  %247 = vmatprep.subr.mxu0 0.0
  %248 = vmatpush1.msra.mxu0 0.0
  %249 = vmatprep.subr.mxu0 0.0
  %250 = vmatpush1.msra.mxu0 0.0
  %251 = vmatprep.subr.mxu0 0.0
  %252 = vmatpush1.msra.mxu0 0.0
  %253 = vmatprep.subr.mxu0 0.0
  %254 = vmatpush1.msra.mxu0 0.0
  %255 = vmatprep.subr.mxu0 0.0
  %256 = vmatpush1.msra.mxu0 0.0
  %257 = vmatprep.subr.mxu0 0.0
  %258 = vmatpush1.msra.mxu0 0.0
  %259 = vmatprep.subr.mxu0 0.0
  %260 = vmatpush1.msra.mxu0 0.0
  %261 = vmatprep.subr.mxu0 0.0
  %262 = vmatpush1.msra.mxu0 0.0
  %263 = vmatprep.subr.mxu0 0.0
  %264 = vmatpush1.msra.mxu0 0.0
  %265 = vmatprep.subr.mxu0 0.0
  %266 = vmatpush1.msra.mxu0 0.0
  %267 = vmatprep.subr.mxu0 0.0
  %268 = vmatpush1.msra.mxu0 0.0
  %269 = vmatprep.subr.mxu0 0.0
  %270 = vmatpush1.msra.mxu0 0.0
  %271 = vmatprep.subr.mxu0 0.0
  %272 = vmatpush1.msra.mxu0 0.0
  %273 = vmatprep.subr.mxu0 0.0
  %274 = vmatpush1.msra.mxu0 0.0
  %275 = vmatprep.subr.mxu0 0.0
  %276 = vmatpush1.msra.mxu0 0.0
  %277 = vmatprep.subr.mxu0 0.0
  %278 = vmatpush1.msra.mxu0 0.0
  %279 = vmatprep.subr.mxu0 0.0
  %280 = vmatpush1.msra.mxu0 0.0
  %281 = vmatprep.subr.mxu0 0.0
  %282 = vmatpush1.msra.mxu0 0.0
  %283 = vmatprep.subr.mxu0 0.0
  %284 = vmatpush1.msra.mxu0 0.0
  %285 = vmatprep.subr.mxu0 0.0
  %286 = vmatpush1.msra.mxu0 0.0
  %287 = vmatprep.subr.mxu0 0.0
  %288 = vmatpush1.msra.mxu0 0.0
  %289 = vmatprep.subr.mxu0 0.0
  %290 = vmatpush1.msra.mxu0 0.0
  %291 = vmatprep.subr.mxu0 0.0
  %292 = vmatpush1.msra.mxu0 0.0
  %293 = vmatprep.subr.mxu0 0.0
  %294 = vmatpush1.msra.mxu0 0.0
  %295 = vmatprep.subr.mxu0 0.0
  %296 = vmatpush1.msra.mxu0 0.0
  %297 = vmatprep.subr.mxu0 0.0
  %298 = vmatpush1.msra.mxu0 0.0
  %299 = vmatprep.mubr.f32.mxu0 0.0
  %300 = vmatmul.mubr.f32.gmra.mrb[0].mxu0 %v233
  %v301 = vpop.f32.mrb[0].mxu0
  %v302 = vadd.f32 %v231, %v301
  %v303 = vpop.f32.mrb[0].mxu0
  %304 = vdwg.mxu0
  %305 = vst [vmem:[%s4] sm:$0xff] %v302
  // Predicated region
  $region18: #{text_model_forward.1} parent=0 // pred_check
    _
  $region19: #{text_model_forward.1} parent=0 // pred_check_branch
    %307 = sbr.rel (0) target = $region21
  $region20: #{text_model_forward.1} parent=0 // pred_region
    _
  $region21: #{text_model_forward.1} parent=0 // pred_fallthru
    _
  // Predicated region
  $region22: #{text_model_forward.1} parent=0 // pred_check
    _
  $region23: #{text_model_forward.1} parent=0 // pred_check_branch
    %309 = sbr.rel (0) target = $region25
  $region24: #{text_model_forward.1} parent=0 // pred_region
    _
  $region25: #{text_model_forward.1} parent=0 // pred_fallthru
    _

</llo_original>
